<compile_context>
chip_gen: v6e
topology: v6e:2x2x1
jax: 0.10.0
libtpu: 0.0.40
codegen_flags: <defaults>
</compile_context>

<pallas_src>
import numpy as np
import jax
import jax.numpy as jnp
from jax.experimental import pallas as pl
from jax.experimental.pallas import tpu as pltpu


def _dma_copy_kernel(x_hbm_ref, o_hbm_ref, sem):
    # Single full-array HBM->HBM DMA: no HBM->VMEM->vreg->VMEM->HBM round
    # trip, no per-grid-step overhead, no VMEM/vreg pressure.
    copy = pltpu.make_async_copy(x_hbm_ref, o_hbm_ref, sem)
    copy.start()
    copy.wait()


def _pallas_hbm_copy(x):
    """Materialize a fresh HBM buffer holding a copy of `x` (same shape)."""
    nbytes = x.size * jnp.dtype(x.dtype).itemsize
    return pl.pallas_call(
        _dma_copy_kernel,
        out_shape=jax.ShapeDtypeStruct(x.shape, x.dtype),
        in_specs=[pl.BlockSpec(memory_space=pl.ANY)],
        out_specs=pl.BlockSpec(memory_space=pl.ANY),
        scratch_shapes=[pltpu.SemaphoreType.DMA],
        cost_estimate=pl.CostEstimate(
            flops=0, transcendentals=0, bytes_accessed=2 * nbytes),
    )(x)


class Reshape:
    """JAX/Pallas equivalent of the PyTorch Reshape(nn.Module).

    __call__(x) is metadata-only by default (matches x.view()).  Pass
    force_copy=True to additionally materialize a fresh contiguous buffer
    via a single HBM->HBM DMA Pallas kernel.
    """

    def __init__(self, *args):
        self.shape = args

    def __call__(self, x, *, force_copy=False):
        # Resolve possible -1 in the target shape (torch .view semantics).
        target = list(self.shape)
        total = int(np.prod(x.shape))
        if -1 in target:
            idx = target.index(-1)
            known = int(np.prod([d for d in target if d != -1]))
            target[idx] = total // known
        assert int(np.prod(target)) == total, "view(): size mismatch"
        target = tuple(target)

        # Default (and recommended) path: metadata-only reshape.
        y = jnp.reshape(x, target)
        if not force_copy:
            return y

        # Explicit physical copy: direct HBM->HBM DMA of the reshaped buffer.
        return _pallas_hbm_copy(y)


if __name__ == "__main__":
    key = jax.random.PRNGKey(0)
    k1, k2 = jax.random.split(key)

    # 1) Small NCHW input (8 KiB) -> default metadata-only path (no kernel).
    x = jax.random.normal(k1, (2, 4, 16, 16), dtype=jnp.float32)
    y = Reshape(2, 1024)(x)
    y = jax.block_until_ready(y)
    ref = jnp.reshape(x, (2, 1024))
    assert y.shape == (2, 1024) and y.dtype == x.dtype
    np.testing.assert_array_equal(np.asarray(y), np.asarray(ref))

    # 2) force_copy path -> exercises the Pallas HBM->HBM DMA kernel once.
    x_big = jax.random.normal(k2, (2, 4, 64, 64), dtype=jnp.float32)
    y_big = Reshape(2, -1)(x_big, force_copy=True)
    y_big = jax.block_until_ready(y_big)
    ref_big = jnp.reshape(x_big, (2, -1))
    assert y_big.shape == (2, 16384) and y_big.dtype == x_big.dtype
    np.testing.assert_array_equal(np.asarray(y_big), np.asarray(ref_big))

    print("KERNEL_OK")
</pallas_src>

<mosaic_0001>
module attributes {stable_mosaic.version = 11 : i64} {
  func.func @_dma_copy_kernel(%arg0: memref<2x16384xf32, #tpu.memory_space<any>>, %arg1: memref<2x16384xf32, #tpu.memory_space<any>>, %arg2: memref<!tpu.dma_semaphore, #tpu.memory_space<semaphore_mem>>) attributes {dimension_semantics = [], scalar_prefetch = 0 : i64, scratch_operands = 1 : i64, tpu.core_type = #tpu.core_type<tc>} {
    tpu.enqueue_dma source(%arg0 : memref<2x16384xf32, #tpu.memory_space<any>>) target(%arg1 : memref<2x16384xf32, #tpu.memory_space<any>>) target_semaphore(%arg2 : memref<!tpu.dma_semaphore, #tpu.memory_space<semaphore_mem>>)
    tpu.wait_dma2 semaphore(%arg2 : memref<!tpu.dma_semaphore, #tpu.memory_space<semaphore_mem>>) src(%arg0 : memref<2x16384xf32, #tpu.memory_space<any>>) dst(%arg1 : memref<2x16384xf32, #tpu.memory_space<any>>)
    return
  }
}

</mosaic_0001>

<llo_original>
// kernel: tpu_custom_call.1
$region0: #{tpu_custom_call.1}
  #allocation0 [shape = 'u32[]', space=smem, size = 0x4, offset = 0x4, fixed_abs, tag = 'smem constant byte address 0x4 - core index']
  #allocation1 [shape = 'u32[144,128]{1,0:T(1,128)}', space=vmem, size = 0x12000, scoped, tag = 'internal scratch']
  #allocation2 [shape = 's32[1]{0}', space=sflag, size = 0x4, scoped, tag = 'scratch operand']
  #allocation3 [shape = 's32[]', space=sflag, size = 0x4, offset = 0, fixed_abs, tag = 'sflag constant byte address 0x0 - dummy sync flag']
  #allocation4 [shape = 'u32[0]{0}', space=smem, size = 0, offset = 0, fixed_abs, tag = 'smem constant byte address 0x0 - null']
  %s0 = inlined_call_operand.hbm [shape: f32[2,16384], index: 0, kind: input, shape index: {}]
  %s1 = inlined_call_operand.hbm [shape: f32[2,16384], index: 1, kind: output, shape index: {}]
  %s2 = sld [smem:[#allocation0]]
  $region2: #{tpu_custom_call.1} parent=0
    _
  %s4 = ssub.s32 1, %s2
  %s5 = scalar_select 0, %s4, %s2
  %s7 = sshll.u32 1, 14
  %s8 = sxor.u32 4294967295, %s7
  %12 = dma.general %s0, 4096, %s1, [#allocation2], 131072, [#allocation4], 0, 0
  %s13 = smul.u32 2, 1
  %s14 = smul.u32 %s13, 128
  %s15 = sshll.u32 %s14, 4
  %16 = dma.done [#allocation2], %s15
  %17 = vsyncmov [#allocation2]
  %s18 = vpop.sfrf %17
  %p19 = scmp.eq.s32.totalorder %s18, 0
  %p20 = pneg %p19
  %22 = shalt.err (%p20)

</llo_original>
